<compile_context>
chip_gen: v6e
topology: v6e:2x2x1
jax: 0.10.0
libtpu: 0.0.40
codegen_flags: <defaults>
</compile_context>

<pallas_src>
import jax
import jax.numpy as jnp
from jax.experimental import pallas as pl
from jax.experimental.pallas import tpu as pltpu


def _round_up(x: int, m: int) -> int:
    return (x + m - 1) // m * m


def _pick_block_rows(total_rows: int, bytes_per_row: int, sub: int) -> int:
    """Row-block size: ~10 MiB double-buffered footprint, >=2 grid steps if possible."""
    budget = 10 * 1024 * 1024
    r = max(sub, budget // (2 * bytes_per_row))
    r = max(sub, (r // sub) * sub)
    if total_rows <= 2 * sub:
        return total_rows                      # single block == full dim (always legal)
    return max(sub, min(r, _round_up(pl.cdiv(total_rows, 2), sub)))


# ----------------------------------------------------------------------------
# Dense-packed fast path: input viewed as (M, 128), 128//N logical rows per
# VMEM row.  Group reduction via MXU matmul with a 0/1 selector.
# ----------------------------------------------------------------------------
def _make_packed_kernel(n_agents: int, groups: int):
    def kernel(x_ref, o_ref):
        # x_ref: (Rm, 128) tile, each lane-row holds `groups` rows of `n_agents`.
        # o_ref: (Rm, groups) tile of per-row nan-means.
        x = x_ref[...].astype(jnp.float32)
        nan_mask = jnp.isnan(x)
        x_clean = jnp.where(nan_mask, 0.0, x)
        valid = (~nan_mask).astype(jnp.float32)

        # 0/1 selector: column j picks lanes [j*N, (j+1)*N).
        lane = jax.lax.broadcasted_iota(jnp.int32, (128, groups), 0)
        grp = jax.lax.broadcasted_iota(jnp.int32, (128, groups), 1)
        sel = ((lane >= grp * n_agents) & (lane < (grp + 1) * n_agents)
               ).astype(jnp.float32)

        # MXU group-sum / group-count; HIGHEST precision => f32-accurate sums.
        # NOTE: +/-inf inputs would leak NaN into sibling groups of the same
        # 128-lane row here (inf*0); NaN handling (the module's contract) is exact.
        sums = jnp.dot(x_clean, sel, preferred_element_type=jnp.float32,
                       precision=jax.lax.Precision.HIGHEST)
        cnts = jnp.dot(valid, sel, preferred_element_type=jnp.float32,
                       precision=jax.lax.Precision.HIGHEST)
        # 0/0 -> NaN for all-NaN rows (matches torch.nanmean).
        o_ref[...] = (sums / cnts).astype(o_ref.dtype)
    return kernel


# ----------------------------------------------------------------------------
# Fallback path: (R, N) tile (agents on lanes), lane-dense (1, 1, R) output.
# ----------------------------------------------------------------------------
def _nanmean_rows_kernel(x_ref, o_ref):
    x = x_ref[...].astype(jnp.float32)
    nan_mask = jnp.isnan(x)
    x_clean = jnp.where(nan_mask, 0.0, x)
    valid = (~nan_mask).astype(jnp.float32)
    s = jnp.sum(x_clean, axis=1)     # (R,)
    cnt = jnp.sum(valid, axis=1)     # (R,)
    mean = s / cnt                   # 0/0 -> NaN for all-NaN rows
    o_ref[...] = mean.astype(o_ref.dtype)[None, None, :]


def vdn_nanmean(q_values, dim=2):
    """Pallas equivalent of VDNNet.forward: nanmean over `dim`, keepdim=True."""
    assert q_values.ndim >= 1
    axis = dim + q_values.ndim if dim < 0 else dim
    # TODO(synk): non-trailing reduction dims would need a wrapper transpose
    # (an extra HBM pass); the module's default dim=2 on (B, T, N) is trailing.
    assert axis == q_values.ndim - 1, (
        "kernel implements the module's default reduce-over-last-(agent)-axis path")
    assert jnp.issubdtype(q_values.dtype, jnp.floating), (
        "nanmean is only defined for floating-point inputs")

    shape = q_values.shape
    N = shape[-1]
    rows = 1
    for s in shape[:-1]:
        rows *= s
    assert rows > 0 and N > 0
    out_shape_keepdim = shape[:-1] + (1,)

    itemsize = q_values.dtype.itemsize
    sub = max(8, 32 // itemsize)        # sublane multiple: 8 f32, 16 bf16/f16
    cost = pl.CostEstimate(
        flops=6 * rows * N,
        transcendentals=0,
        bytes_accessed=rows * N * itemsize + rows * itemsize,
    )
    cparams = pltpu.CompilerParams(dimension_semantics=("parallel",))

    dense_ok = (128 % N == 0) and (rows % (128 // N) == 0)

    if dense_ok:
        g = 128 // N                    # logical rows per packed 128-lane row
        M = rows // g                   # packed rows; rows*N == M*128
        x_packed = q_values.reshape(M, 128)          # free: contiguous row-major

        Rm = _pick_block_rows(M, (128 + g) * itemsize, sub)
        G = pl.cdiv(M, Rm)

        out = pl.pallas_call(
            _make_packed_kernel(N, g),
            out_shape=jax.ShapeDtypeStruct((M, g), q_values.dtype),
            grid=(G,),
            in_specs=[pl.BlockSpec((Rm, 128), lambda i: (i, 0))],
            out_specs=pl.BlockSpec((Rm, g), lambda i: (i, 0)),
            compiler_params=cparams,
            cost_estimate=cost,
        )(x_packed)
        return out.reshape(out_shape_keepdim)

    # Fallback: awkward agent counts (e.g. N=7) or row counts.
    x2d = q_values.reshape(rows, N)
    R = _pick_block_rows(rows, (128 + 8) * itemsize, sub)
    G = pl.cdiv(rows, R)

    out_blocks = pl.pallas_call(
        _nanmean_rows_kernel,
        out_shape=jax.ShapeDtypeStruct((G, 1, R), q_values.dtype),
        grid=(G,),
        in_specs=[pl.BlockSpec((R, N), lambda i: (i, 0))],
        out_specs=pl.BlockSpec((1, 1, R), lambda i: (i, 0, 0)),
        compiler_params=cparams,
        cost_estimate=cost,
    )(x2d)
    # Ragged tail rows of the last block are garbage; discard them here.
    out_flat = out_blocks.reshape(G * R)[:rows]
    return out_flat.reshape(out_shape_keepdim)


def _check(q):
    out = jax.block_until_ready(vdn_nanmean(q, dim=2))
    ref = jnp.nanmean(q, axis=2, keepdims=True)
    assert out.shape == ref.shape, (out.shape, ref.shape)
    both_nan = jnp.isnan(out) & jnp.isnan(ref)
    close = jnp.isclose(out, ref, rtol=1e-5, atol=1e-5)
    assert bool(jnp.all(both_nan | close)), "mismatch vs jnp.nanmean reference"


if __name__ == "__main__":
    key = jax.random.PRNGKey(0)
    k1, k2, k3, k4, k5, k6 = jax.random.split(key, 6)

    # 1) Dense-packed fast path, (batch, time, n_agents) = (2, 8, 16).
    B, T, N = 2, 8, 16
    q = jax.random.normal(k1, (B, T, N), dtype=jnp.float32)
    q = jnp.where(jax.random.uniform(k2, (B, T, N)) < 0.2, jnp.nan, q)
    q = q.at[0, 0, :].set(jnp.nan)   # all-NaN slice -> NaN output (0/0 path)
    _check(q)

    # 2) Dense path with multiple grid steps and a ragged final block.
    B2, T2, N2 = 2, 520, 16
    q2 = jax.random.normal(k3, (B2, T2, N2), dtype=jnp.float32)
    q2 = jnp.where(jax.random.uniform(k4, (B2, T2, N2)) < 0.1, jnp.nan, q2)
    _check(q2)

    # 3) Fallback path: agent count that does not divide 128.
    B3, T3, N3 = 2, 50, 7
    q3 = jax.random.normal(k5, (B3, T3, N3), dtype=jnp.float32)
    q3 = jnp.where(jax.random.uniform(k6, (B3, T3, N3)) < 0.15, jnp.nan, q3)
    _check(q3)

    print("KERNEL_OK")
</pallas_src>

<mosaic_0001>
module attributes {stable_mosaic.version = 11 : i64} {
  func.func @kernel(%arg0: i32, %arg1: memref<2x128xf32, #tpu.memory_space<vmem>>, %arg2: memref<2x8xf32, #tpu.memory_space<vmem>>) attributes {dimension_semantics = [#tpu.dimension_semantics<parallel>], iteration_bounds = array<i64: 1>, scalar_prefetch = 0 : i64, scratch_operands = 0 : i64, tpu.core_type = #tpu.core_type<tc>, window_params = [{transform_indices = @transform_0, window_bounds = array<i64: 2, 128>}, {transform_indices = @transform_1, window_bounds = array<i64: 2, 8>}]} {
    %c0 = arith.constant 0 : index
    %c0_0 = arith.constant 0 : index
    %0 = vector.load %arg1[%c0, %c0_0] : memref<2x128xf32, #tpu.memory_space<vmem>>, vector<2x128xf32>
    %1 = arith.cmpf one, %0, %0 : vector<2x128xf32>
    %cst = arith.constant 0.000000e+00 : f32
    %2 = vector.broadcast %cst : f32 to vector<2x128xf32>
    %3 = arith.select %1, %2, %0 : vector<2x128xi1>, vector<2x128xf32>
    %cst_1 = arith.constant dense<true> : vector<2x128xi1>
    %4 = arith.xori %1, %cst_1 : vector<2x128xi1>
    %5 = arith.extui %4 : vector<2x128xi1> to vector<2x128xi32>
    %6 = arith.sitofp %5 : vector<2x128xi32> to vector<2x128xf32>
    %7 = tpu.iota {dimensions = array<i32: 0>} : vector<128x8xi32>
    %8 = tpu.iota {dimensions = array<i32: 1>} : vector<128x8xi32>
    %c16_i32 = arith.constant 16 : i32
    %9 = vector.broadcast %c16_i32 : i32 to vector<128x8xi32>
    %10 = arith.muli %8, %9 : vector<128x8xi32>
    %11 = arith.cmpi sge, %7, %10 : vector<128x8xi32>
    %c1_i32 = arith.constant 1 : i32
    %12 = vector.broadcast %c1_i32 : i32 to vector<128x8xi32>
    %13 = arith.addi %8, %12 : vector<128x8xi32>
    %c16_i32_2 = arith.constant 16 : i32
    %14 = vector.broadcast %c16_i32_2 : i32 to vector<128x8xi32>
    %15 = arith.muli %13, %14 : vector<128x8xi32>
    %16 = arith.cmpi slt, %7, %15 : vector<128x8xi32>
    %17 = arith.andi %11, %16 : vector<128x8xi1>
    %18 = arith.extui %17 : vector<128x8xi1> to vector<128x8xi32>
    %19 = arith.sitofp %18 : vector<128x8xi32> to vector<128x8xf32>
    %cst_3 = arith.constant dense<0.000000e+00> : vector<2x8xf32>
    %20 = tpu.matmul %3, %19, %cst_3 {dimension_numbers = #tpu.dot_dimension_numbers<[1], [0], [0], [1], [0, 0, 1, 1], [], []>, precision = #tpu.contract_precision<fp32>} : vector<2x128xf32>, vector<128x8xf32>, vector<2x8xf32> -> vector<2x8xf32>
    %cst_4 = arith.constant dense<0.000000e+00> : vector<2x8xf32>
    %21 = tpu.matmul %6, %19, %cst_4 {dimension_numbers = #tpu.dot_dimension_numbers<[1], [0], [0], [1], [0, 0, 1, 1], [], []>, precision = #tpu.contract_precision<fp32>} : vector<2x128xf32>, vector<128x8xf32>, vector<2x8xf32> -> vector<2x8xf32>
    %22 = arith.divf %20, %21 : vector<2x8xf32>
    %c0_5 = arith.constant 0 : index
    %c0_6 = arith.constant 0 : index
    %23 = vector.load %arg2[%c0_5, %c0_6] : memref<2x8xf32, #tpu.memory_space<vmem>>, vector<2x8xf32>
    tpu.vector_store %arg2[%c0_5, %c0_6], %22 {strides = array<i32>} : memref<2x8xf32, #tpu.memory_space<vmem>>, vector<2x8xf32>,
    return
  }
  func.func @transform_0(%arg0: i32) -> (i32, i32) {
    %c0_i32 = arith.constant 0 : i32
    %c0_i32_0 = arith.constant 0 : i32
    return %arg0, %c0_i32 : i32, i32
  }
  func.func @transform_1(%arg0: i32) -> (i32, i32) {
    %c0_i32 = arith.constant 0 : i32
    %c0_i32_0 = arith.constant 0 : i32
    return %arg0, %c0_i32 : i32, i32
  }
}

</mosaic_0001>

<llo_original>
// kernel: tpu_custom_call.1
$region0: #{tpu_custom_call.1}
  #allocation0 [shape = 'u32[]', space=smem, size = 0x4, offset = 0x4, fixed_abs, tag = 'smem constant byte address 0x4 - core index']
  #allocation1 [shape = 'u32[144,128]{1,0:T(1,128)}', space=vmem, size = 0x12000, scoped, tag = 'internal scratch']
  %s0 = inlined_call_operand.hbm [shape: f32[2,128], index: 0, kind: input, shape index: {}]
  %s1 = inlined_call_operand.hbm [shape: f32[2,8], index: 1, kind: output, shape index: {}]
  %s2 = sld [smem:[#allocation0]]
  $region18: #{tpu_custom_call.1} parent=0
    _
  %s4 = ssub.s32 1, %s2
  %s5 = scalar_select 0, %s4, %s2
  $region1: #{tpu_custom_call.1} parent=0
    #allocation2 [shape = 'u8[1024]{0}', space=vmem, size = 0x400, scoped, tag = 'input window, operand 0, single buffered']
    #allocation3 [shape = 's32[1]{0}', space=sflag, size = 0x4, scoped, tag = 'scoped memory for tpu_custom_call.1']
    #allocation4 [shape = 's32[1]{0}', space=sflag, size = 0x4, scoped, tag = 'scoped memory for tpu_custom_call.1']
    #allocation5 [shape = 'u8[1024]{0}', space=vmem, size = 0x400, scoped, tag = 'output window, operand 0, single buffered']
    %6 = vsyncpa [#allocation3], 0
    %7 = vsyncpa [#allocation4], 0
    // Predicated region
    $region2: #{tpu_custom_call.1} parent=1 // pred_check
      _
    $region3: #{tpu_custom_call.1} parent=1 // pred_check_branch
      %9 = sbr.rel (0) target = $region5
    $region4: #{tpu_custom_call.1} parent=1 // pred_region
      %s11 = ssub.s32 32, 32
      %12 = vsyncadd [#allocation3], %s11
      %s14 = sshll.u32 [#allocation2], 4
      %s15 = int_to_ptr.vmem [resolvable:$true] %s14
      %17 = dma.hbm_to_vmem [thread:$0]  %s0, 32, %s15, [#allocation3]
    $region5: #{tpu_custom_call.1} parent=1 // pred_fallthru
      _
    // Predicated region
    $region6: #{tpu_custom_call.1} parent=1 // pred_check
      _
    $region7: #{tpu_custom_call.1} parent=1 // pred_check_branch
      %19 = sbr.rel (0) target = $region9
    $region8: #{tpu_custom_call.1} parent=1 // pred_region
      %20 = dma.done [#allocation3], 32
    $region9: #{tpu_custom_call.1} parent=1 // pred_fallthru
      _
    %v21 = vld [vmem:[#allocation2] sm:$0x3]
    %vm22 = vcmp.ne.f32.partialorder %v21, %v21
    %v23 = vsel %vm22, 0.0, %v21
    %vm24 = vmxor %vm22, 1
    %v25 = vsel %vm24, 1, 0
    %v26 = vcvt.s32.f32 %v25
    %v27 = vlaneseq
    %v28 = vshrl.u32 %v27, 7
    %v29 = vadd.s32 %v28, 8
    %v30 = vadd.s32 %v28, 16
    %v31 = vadd.s32 %v28, 24
    %v32 = vadd.s32 %v28, 32
    %v33 = vadd.s32 %v28, 40
    %v34 = vadd.s32 %v28, 48
    %v35 = vadd.s32 %v28, 56
    %v36 = vadd.s32 %v28, 64
    %v37 = vadd.s32 %v28, 72
    %v38 = vadd.s32 %v28, 80
    %v39 = vadd.s32 %v28, 88
    %v40 = vadd.s32 %v28, 96
    %v41 = vadd.s32 %v28, 104
    %v42 = vadd.s32 %v28, 112
    %v43 = vadd.s32 %v28, 120
    %v44 = vlaneseq
    %v45 = vand.u32 %v44, 127
    %v46 = vmul.u32 %v45, 16
    %vm47 = vcmp.ge.s32.totalorder %v28, %v46
    %vm48 = vcmp.ge.s32.totalorder %v29, %v46
    %vm49 = vcmp.ge.s32.totalorder %v30, %v46
    %vm50 = vcmp.ge.s32.totalorder %v31, %v46
    %vm51 = vcmp.ge.s32.totalorder %v32, %v46
    %vm52 = vcmp.ge.s32.totalorder %v33, %v46
    %vm53 = vcmp.ge.s32.totalorder %v34, %v46
    %vm54 = vcmp.ge.s32.totalorder %v35, %v46
    %vm55 = vcmp.ge.s32.totalorder %v36, %v46
    %vm56 = vcmp.ge.s32.totalorder %v37, %v46
    %vm57 = vcmp.ge.s32.totalorder %v38, %v46
    %vm58 = vcmp.ge.s32.totalorder %v39, %v46
    %vm59 = vcmp.ge.s32.totalorder %v40, %v46
    %vm60 = vcmp.ge.s32.totalorder %v41, %v46
    %vm61 = vcmp.ge.s32.totalorder %v42, %v46
    %vm62 = vcmp.ge.s32.totalorder %v43, %v46
    %v63 = vadd.s32 %v45, 1
    %v64 = vmul.u32 %v63, 16
    %vm65 = vcmp.lt.s32.totalorder %v28, %v64
    %vm66 = vcmp.lt.s32.totalorder %v29, %v64
    %vm67 = vcmp.lt.s32.totalorder %v30, %v64
    %vm68 = vcmp.lt.s32.totalorder %v31, %v64
    %vm69 = vcmp.lt.s32.totalorder %v32, %v64
    %vm70 = vcmp.lt.s32.totalorder %v33, %v64
    %vm71 = vcmp.lt.s32.totalorder %v34, %v64
    %vm72 = vcmp.lt.s32.totalorder %v35, %v64
    %vm73 = vcmp.lt.s32.totalorder %v36, %v64
    %vm74 = vcmp.lt.s32.totalorder %v37, %v64
    %vm75 = vcmp.lt.s32.totalorder %v38, %v64
    %vm76 = vcmp.lt.s32.totalorder %v39, %v64
    %vm77 = vcmp.lt.s32.totalorder %v40, %v64
    %vm78 = vcmp.lt.s32.totalorder %v41, %v64
    %vm79 = vcmp.lt.s32.totalorder %v42, %v64
    %vm80 = vcmp.lt.s32.totalorder %v43, %v64
    %vm81 = vmand %vm47, %vm65
    %vm82 = vmand %vm48, %vm66
    %vm83 = vmand %vm49, %vm67
    %vm84 = vmand %vm50, %vm68
    %vm85 = vmand %vm51, %vm69
    %vm86 = vmand %vm52, %vm70
    %vm87 = vmand %vm53, %vm71
    %vm88 = vmand %vm54, %vm72
    %vm89 = vmand %vm55, %vm73
    %vm90 = vmand %vm56, %vm74
    %vm91 = vmand %vm57, %vm75
    %vm92 = vmand %vm58, %vm76
    %vm93 = vmand %vm59, %vm77
    %vm94 = vmand %vm60, %vm78
    %vm95 = vmand %vm61, %vm79
    %vm96 = vmand %vm62, %vm80
    %v97 = vsel %vm81, 1, 0
    %v98 = vsel %vm82, 1, 0
    %v99 = vsel %vm83, 1, 0
    %v100 = vsel %vm84, 1, 0
    %v101 = vsel %vm85, 1, 0
    %v102 = vsel %vm86, 1, 0
    %v103 = vsel %vm87, 1, 0
    %v104 = vsel %vm88, 1, 0
    %v105 = vsel %vm89, 1, 0
    %v106 = vsel %vm90, 1, 0
    %v107 = vsel %vm91, 1, 0
    %v108 = vsel %vm92, 1, 0
    %v109 = vsel %vm93, 1, 0
    %v110 = vsel %vm94, 1, 0
    %v111 = vsel %vm95, 1, 0
    %v112 = vsel %vm96, 1, 0
    %v113 = vcvt.s32.f32 %v97
    %v114 = vcvt.s32.f32 %v98
    %v115 = vcvt.s32.f32 %v99
    %v116 = vcvt.s32.f32 %v100
    %v117 = vcvt.s32.f32 %v101
    %v118 = vcvt.s32.f32 %v102
    %v119 = vcvt.s32.f32 %v103
    %v120 = vcvt.s32.f32 %v104
    %v121 = vcvt.s32.f32 %v105
    %v122 = vcvt.s32.f32 %v106
    %v123 = vcvt.s32.f32 %v107
    %v124 = vcvt.s32.f32 %v108
    %v125 = vcvt.s32.f32 %v109
    %v126 = vcvt.s32.f32 %v110
    %v127 = vcvt.s32.f32 %v111
    %v128 = vcvt.s32.f32 %v112
    %129 = vmatprep.subr.mxu0 0.0
    %v130 = vand.u32 %v128, 4294901760
    %131 = vmatpush1.msra.mxu0 %v130
    %132 = vmatprep.subr.mxu0 0.0
    %v133 = vand.u32 %v127, 4294901760
    %134 = vmatpush1.msra.mxu0 %v133
    %135 = vmatprep.subr.mxu0 0.0
    %v136 = vand.u32 %v126, 4294901760
    %137 = vmatpush1.msra.mxu0 %v136
    %138 = vmatprep.subr.mxu0 0.0
    %v139 = vand.u32 %v125, 4294901760
    %140 = vmatpush1.msra.mxu0 %v139
    %141 = vmatprep.subr.mxu0 0.0
    %v142 = vand.u32 %v124, 4294901760
    %143 = vmatpush1.msra.mxu0 %v142
    %144 = vmatprep.subr.mxu0 0.0
    %v145 = vand.u32 %v123, 4294901760
    %146 = vmatpush1.msra.mxu0 %v145
    %147 = vmatprep.subr.mxu0 0.0
    %v148 = vand.u32 %v122, 4294901760
    %149 = vmatpush1.msra.mxu0 %v148
    %150 = vmatprep.subr.mxu0 0.0
    %v151 = vand.u32 %v121, 4294901760
    %152 = vmatpush1.msra.mxu0 %v151
    %153 = vmatprep.subr.mxu0 0.0
    %v154 = vand.u32 %v120, 4294901760
    %155 = vmatpush1.msra.mxu0 %v154
    %156 = vmatprep.subr.mxu0 0.0
    %v157 = vand.u32 %v119, 4294901760
    %158 = vmatpush1.msra.mxu0 %v157
    %159 = vmatprep.subr.mxu0 0.0
    %v160 = vand.u32 %v118, 4294901760
    %161 = vmatpush1.msra.mxu0 %v160
    %162 = vmatprep.subr.mxu0 0.0
    %v163 = vand.u32 %v117, 4294901760
    %164 = vmatpush1.msra.mxu0 %v163
    %165 = vmatprep.subr.mxu0 0.0
    %v166 = vand.u32 %v116, 4294901760
    %167 = vmatpush1.msra.mxu0 %v166
    %168 = vmatprep.subr.mxu0 0.0
    %v169 = vand.u32 %v115, 4294901760
    %170 = vmatpush1.msra.mxu0 %v169
    %171 = vmatprep.subr.mxu0 0.0
    %v172 = vand.u32 %v114, 4294901760
    %173 = vmatpush1.msra.mxu0 %v172
    %174 = vmatprep.subr.mxu0 0.0
    %v175 = vand.u32 %v113, 4294901760
    %176 = vmatpush1.msra.mxu0 %v175
    %177 = vmatprep.subr.mxu0 0.0
    %178 = vmatpush2.msra.mxu0 0.0
    %179 = vmatprep.subr.mxu0 0.0
    %180 = vmatpush2.msra.mxu0 0.0
    %181 = vmatprep.subr.mxu0 0.0
    %182 = vmatpush2.msra.mxu0 0.0
    %183 = vmatprep.subr.mxu0 0.0
    %184 = vmatpush2.msra.mxu0 0.0
    %185 = vmatprep.subr.mxu0 0.0
    %186 = vmatpush2.msra.mxu0 0.0
    %187 = vmatprep.subr.mxu0 0.0
    %188 = vmatpush2.msra.mxu0 0.0
    %189 = vmatprep.subr.mxu0 0.0
    %190 = vmatpush2.msra.mxu0 0.0
    %191 = vmatprep.subr.mxu0 0.0
    %192 = vmatpush2.msra.mxu0 0.0
    %193 = vmatprep.subr.mxu0 0.0
    %194 = vmatpush2.msra.mxu0 0.0
    %195 = vmatprep.subr.mxu0 0.0
    %196 = vmatpush2.msra.mxu0 0.0
    %197 = vmatprep.subr.mxu0 0.0
    %198 = vmatpush2.msra.mxu0 0.0
    %199 = vmatprep.subr.mxu0 0.0
    %200 = vmatpush2.msra.mxu0 0.0
    %201 = vmatprep.subr.mxu0 0.0
    %202 = vmatpush2.msra.mxu0 0.0
    %203 = vmatprep.subr.mxu0 0.0
    %204 = vmatpush2.msra.mxu0 0.0
    %205 = vmatprep.subr.mxu0 0.0
    %206 = vmatpush2.msra.mxu0 0.0
    %207 = vmatprep.subr.mxu0 0.0
    %208 = vmatpush2.msra.mxu0 0.0
    %209 = vmatprep.mubr.f32.mxu0 0.0
    %v210 = vand.u32 %v23, 4294901760
    %v211 = vsub.f32 %v23, %v210
    %v212 = vand.u32 %v211, 4294901760
    %v213 = vsub.f32 %v211, %v212
    %v214 = vand.u32 %v213, 4294901760
    %215 = vmatmul.mubr.f32.gmra.mxu0 %v214
    %v216 = vpop.f32.mrf.mxu0
    %v217 = vadd.f32 0.0, %v216
    %v218 = vpop.f32.mrf.mxu0
    %219 = vdwg.mxu0
    %220 = vmatprep.subr.mxu0 0.0
    %v221 = vand.u32 %v128, 4294901760
    %v222 = vsub.f32 %v128, %v221
    %v223 = vand.u32 %v222, 4294901760
    %v224 = vsub.f32 %v222, %v223
    %v225 = vand.u32 %v224, 4294901760
    %226 = vmatpush1.msra.mxu0 %v225
    %227 = vmatprep.subr.mxu0 0.0
    %v228 = vand.u32 %v127, 4294901760
    %v229 = vsub.f32 %v127, %v228
    %v230 = vand.u32 %v229, 4294901760
    %v231 = vsub.f32 %v229, %v230
    %v232 = vand.u32 %v231, 4294901760
    %233 = vmatpush1.msra.mxu0 %v232
    %234 = vmatprep.subr.mxu0 0.0
    %v235 = vand.u32 %v126, 4294901760
    %v236 = vsub.f32 %v126, %v235
    %v237 = vand.u32 %v236, 4294901760
    %v238 = vsub.f32 %v236, %v237
    %v239 = vand.u32 %v238, 4294901760
    %240 = vmatpush1.msra.mxu0 %v239
    %241 = vmatprep.subr.mxu0 0.0
    %v242 = vand.u32 %v125, 4294901760
    %v243 = vsub.f32 %v125, %v242
    %v244 = vand.u32 %v243, 4294901760
    %v245 = vsub.f32 %v243, %v244
    %v246 = vand.u32 %v245, 4294901760
    %247 = vmatpush1.msra.mxu0 %v246
    %248 = vmatprep.subr.mxu0 0.0
    %v249 = vand.u32 %v124, 4294901760
    %v250 = vsub.f32 %v124, %v249
    %v251 = vand.u32 %v250, 4294901760
    %v252 = vsub.f32 %v250, %v251
    %v253 = vand.u32 %v252, 4294901760
    %254 = vmatpush1.msra.mxu0 %v253
    %255 = vmatprep.subr.mxu0 0.0
    %v256 = vand.u32 %v123, 4294901760
    %v257 = vsub.f32 %v123, %v256
    %v258 = vand.u32 %v257, 4294901760
    %v259 = vsub.f32 %v257, %v258
    %v260 = vand.u32 %v259, 4294901760
    %261 = vmatpush1.msra.mxu0 %v260
    %262 = vmatprep.subr.mxu0 0.0
    %v263 = vand.u32 %v122, 4294901760
    %v264 = vsub.f32 %v122, %v263
    %v265 = vand.u32 %v264, 4294901760
    %v266 = vsub.f32 %v264, %v265
    %v267 = vand.u32 %v266, 4294901760
    %268 = vmatpush1.msra.mxu0 %v267
    %269 = vmatprep.subr.mxu0 0.0
    %v270 = vand.u32 %v121, 4294901760
    %v271 = vsub.f32 %v121, %v270
    %v272 = vand.u32 %v271, 4294901760
    %v273 = vsub.f32 %v271, %v272
    %v274 = vand.u32 %v273, 4294901760
    %275 = vmatpush1.msra.mxu0 %v274
    %276 = vmatprep.subr.mxu0 0.0
    %v277 = vand.u32 %v120, 4294901760
    %v278 = vsub.f32 %v120, %v277
    %v279 = vand.u32 %v278, 4294901760
    %v280 = vsub.f32 %v278, %v279
    %v281 = vand.u32 %v280, 4294901760
    %282 = vmatpush1.msra.mxu0 %v281
    %283 = vmatprep.subr.mxu0 0.0
    %v284 = vand.u32 %v119, 4294901760
    %v285 = vsub.f32 %v119, %v284
    %v286 = vand.u32 %v285, 4294901760
    %v287 = vsub.f32 %v285, %v286
    %v288 = vand.u32 %v287, 4294901760
    %289 = vmatpush1.msra.mxu0 %v288
    %290 = vmatprep.subr.mxu0 0.0
    %v291 = vand.u32 %v118, 4294901760
    %v292 = vsub.f32 %v118, %v291
    %v293 = vand.u32 %v292, 4294901760
    %v294 = vsub.f32 %v292, %v293
    %v295 = vand.u32 %v294, 4294901760
    %296 = vmatpush1.msra.mxu0 %v295
    %297 = vmatprep.subr.mxu0 0.0
    %v298 = vand.u32 %v117, 4294901760
    %v299 = vsub.f32 %v117, %v298
    %v300 = vand.u32 %v299, 4294901760
    %v301 = vsub.f32 %v299, %v300
    %v302 = vand.u32 %v301, 4294901760
    %303 = vmatpush1.msra.mxu0 %v302
    %304 = vmatprep.subr.mxu0 0.0
    %v305 = vand.u32 %v116, 4294901760
    %v306 = vsub.f32 %v116, %v305
    %v307 = vand.u32 %v306, 4294901760
    %v308 = vsub.f32 %v306, %v307
    %v309 = vand.u32 %v308, 4294901760
    %310 = vmatpush1.msra.mxu0 %v309
    %311 = vmatprep.subr.mxu0 0.0
    %v312 = vand.u32 %v115, 4294901760
    %v313 = vsub.f32 %v115, %v312
    %v314 = vand.u32 %v313, 4294901760
    %v315 = vsub.f32 %v313, %v314
    %v316 = vand.u32 %v315, 4294901760
    %317 = vmatpush1.msra.mxu0 %v316
    %318 = vmatprep.subr.mxu0 0.0
    %v319 = vand.u32 %v114, 4294901760
    %v320 = vsub.f32 %v114, %v319
    %v321 = vand.u32 %v320, 4294901760
    %v322 = vsub.f32 %v320, %v321
    %v323 = vand.u32 %v322, 4294901760
    %324 = vmatpush1.msra.mxu0 %v323
    %325 = vmatprep.subr.mxu0 0.0
    %v326 = vand.u32 %v113, 4294901760
    %v327 = vsub.f32 %v113, %v326
    %v328 = vand.u32 %v327, 4294901760
    %v329 = vsub.f32 %v327, %v328
    %v330 = vand.u32 %v329, 4294901760
    %331 = vmatpush1.msra.mxu0 %v330
    %332 = vmatprep.subr.mxu0 0.0
    %333 = vmatpush2.msra.mxu0 0.0
    %334 = vmatprep.subr.mxu0 0.0
    %335 = vmatpush2.msra.mxu0 0.0
    %336 = vmatprep.subr.mxu0 0.0
    %337 = vmatpush2.msra.mxu0 0.0
    %338 = vmatprep.subr.mxu0 0.0
    %339 = vmatpush2.msra.mxu0 0.0
    %340 = vmatprep.subr.mxu0 0.0
    %341 = vmatpush2.msra.mxu0 0.0
    %342 = vmatprep.subr.mxu0 0.0
    %343 = vmatpush2.msra.mxu0 0.0
    %344 = vmatprep.subr.mxu0 0.0
    %345 = vmatpush2.msra.mxu0 0.0
    %346 = vmatprep.subr.mxu0 0.0
    %347 = vmatpush2.msra.mxu0 0.0
    %348 = vmatprep.subr.mxu0 0.0
    %349 = vmatpush2.msra.mxu0 0.0
    %350 = vmatprep.subr.mxu0 0.0
    %351 = vmatpush2.msra.mxu0 0.0
    %352 = vmatprep.subr.mxu0 0.0
    %353 = vmatpush2.msra.mxu0 0.0
    %354 = vmatprep.subr.mxu0 0.0
    %355 = vmatpush2.msra.mxu0 0.0
    %356 = vmatprep.subr.mxu0 0.0
    %357 = vmatpush2.msra.mxu0 0.0
    %358 = vmatprep.subr.mxu0 0.0
    %359 = vmatpush2.msra.mxu0 0.0
    %360 = vmatprep.subr.mxu0 0.0
    %361 = vmatpush2.msra.mxu0 0.0
    %362 = vmatprep.subr.mxu0 0.0
    %363 = vmatpush2.msra.mxu0 0.0
    %364 = vmatprep.mubr.f32.mxu0 0.0
    %v365 = vand.u32 %v23, 4294901760
    %366 = vmatmul.mubr.f32.gmra.mxu0 %v365
    %v367 = vpop.f32.mrf.mxu0
    %v368 = vadd.f32 %v217, %v367
    %v369 = vpop.f32.mrf.mxu0
    %370 = vdwg.mxu0
    %371 = vmatprep.subr.mxu0 0.0
    %v372 = vand.u32 %v128, 4294901760
    %v373 = vsub.f32 %v128, %v372
    %374 = vmatpush1.msra.mxu0 %v373
    %375 = vmatprep.subr.mxu0 0.0
    %v376 = vand.u32 %v127, 4294901760
    %v377 = vsub.f32 %v127, %v376
    %378 = vmatpush1.msra.mxu0 %v377
    %379 = vmatprep.subr.mxu0 0.0
    %v380 = vand.u32 %v126, 4294901760
    %v381 = vsub.f32 %v126, %v380
    %382 = vmatpush1.msra.mxu0 %v381
    %383 = vmatprep.subr.mxu0 0.0
    %v384 = vand.u32 %v125, 4294901760
    %v385 = vsub.f32 %v125, %v384
    %386 = vmatpush1.msra.mxu0 %v385
    %387 = vmatprep.subr.mxu0 0.0
    %v388 = vand.u32 %v124, 4294901760
    %v389 = vsub.f32 %v124, %v388
    %390 = vmatpush1.msra.mxu0 %v389
    %391 = vmatprep.subr.mxu0 0.0
    %v392 = vand.u32 %v123, 4294901760
    %v393 = vsub.f32 %v123, %v392
    %394 = vmatpush1.msra.mxu0 %v393
    %395 = vmatprep.subr.mxu0 0.0
    %v396 = vand.u32 %v122, 4294901760
    %v397 = vsub.f32 %v122, %v396
    %398 = vmatpush1.msra.mxu0 %v397
    %399 = vmatprep.subr.mxu0 0.0
    %v400 = vand.u32 %v121, 4294901760
    %v401 = vsub.f32 %v121, %v400
    %402 = vmatpush1.msra.mxu0 %v401
    %403 = vmatprep.subr.mxu0 0.0
    %v404 = vand.u32 %v120, 4294901760
    %v405 = vsub.f32 %v120, %v404
    %406 = vmatpush1.msra.mxu0 %v405
    %407 = vmatprep.subr.mxu0 0.0
    %v408 = vand.u32 %v119, 4294901760
    %v409 = vsub.f32 %v119, %v408
    %410 = vmatpush1.msra.mxu0 %v409
    %411 = vmatprep.subr.mxu0 0.0
    %v412 = vand.u32 %v118, 4294901760
    %v413 = vsub.f32 %v118, %v412
    %414 = vmatpush1.msra.mxu0 %v413
    %415 = vmatprep.subr.mxu0 0.0
    %v416 = vand.u32 %v117, 4294901760
    %v417 = vsub.f32 %v117, %v416
    %418 = vmatpush1.msra.mxu0 %v417
    %419 = vmatprep.subr.mxu0 0.0
    %v420 = vand.u32 %v116, 4294901760
    %v421 = vsub.f32 %v116, %v420
    %422 = vmatpush1.msra.mxu0 %v421
    %423 = vmatprep.subr.mxu0 0.0
    %v424 = vand.u32 %v115, 4294901760
    %v425 = vsub.f32 %v115, %v424
    %426 = vmatpush1.msra.mxu0 %v425
    %427 = vmatprep.subr.mxu0 0.0
    %v428 = vand.u32 %v114, 4294901760
    %v429 = vsub.f32 %v114, %v428
    %430 = vmatpush1.msra.mxu0 %v429
    %431 = vmatprep.subr.mxu0 0.0
    %v432 = vand.u32 %v113, 4294901760
    %v433 = vsub.f32 %v113, %v432
    %434 = vmatpush1.msra.mxu0 %v433
    %435 = vmatprep.subr.mxu0 0.0
    %436 = vmatpush2.msra.mxu0 0.0
    %437 = vmatprep.subr.mxu0 0.0
    %438 = vmatpush2.msra.mxu0 0.0
    %439 = vmatprep.subr.mxu0 0.0
    %440 = vmatpush2.msra.mxu0 0.0
    %441 = vmatprep.subr.mxu0 0.0
    %442 = vmatpush2.msra.mxu0 0.0
    %443 = vmatprep.subr.mxu0 0.0
    %444 = vmatpush2.msra.mxu0 0.0
    %445 = vmatprep.subr.mxu0 0.0
    %446 = vmatpush2.msra.mxu0 0.0
    %447 = vmatprep.subr.mxu0 0.0
    %448 = vmatpush2.msra.mxu0 0.0
    %449 = vmatprep.subr.mxu0 0.0
    %450 = vmatpush2.msra.mxu0 0.0
    %451 = vmatprep.subr.mxu0 0.0
    %452 = vmatpush2.msra.mxu0 0.0
    %453 = vmatprep.subr.mxu0 0.0
    %454 = vmatpush2.msra.mxu0 0.0
    %455 = vmatprep.subr.mxu0 0.0
    %456 = vmatpush2.msra.mxu0 0.0
    %457 = vmatprep.subr.mxu0 0.0
    %458 = vmatpush2.msra.mxu0 0.0
    %459 = vmatprep.subr.mxu0 0.0
    %460 = vmatpush2.msra.mxu0 0.0
    %461 = vmatprep.subr.mxu0 0.0
    %462 = vmatpush2.msra.mxu0 0.0
    %463 = vmatprep.subr.mxu0 0.0
    %464 = vmatpush2.msra.mxu0 0.0
    %465 = vmatprep.subr.mxu0 0.0
    %466 = vmatpush2.msra.mxu0 0.0
    %467 = vmatprep.mubr.f32.mxu0 0.0
    %v468 = vand.u32 %v23, 4294901760
    %v469 = vsub.f32 %v23, %v468
    %470 = vmatmul.mubr.f32.gmra.mxu0 %v469
    %v471 = vpop.f32.mrf.mxu0
    %v472 = vadd.f32 %v368, %v471
    %v473 = vpop.f32.mrf.mxu0
    %474 = vdwg.mxu0
    %475 = vmatprep.subr.mxu0 0.0
    %v476 = vand.u32 %v128, 4294901760
    %477 = vmatpush1.msra.mxu0 %v476
    %478 = vmatprep.subr.mxu0 0.0
    %v479 = vand.u32 %v127, 4294901760
    %480 = vmatpush1.msra.mxu0 %v479
    %481 = vmatprep.subr.mxu0 0.0
    %v482 = vand.u32 %v126, 4294901760
    %483 = vmatpush1.msra.mxu0 %v482
    %484 = vmatprep.subr.mxu0 0.0
    %v485 = vand.u32 %v125, 4294901760
    %486 = vmatpush1.msra.mxu0 %v485
    %487 = vmatprep.subr.mxu0 0.0
    %v488 = vand.u32 %v124, 4294901760
    %489 = vmatpush1.msra.mxu0 %v488
    %490 = vmatprep.subr.mxu0 0.0
    %v491 = vand.u32 %v123, 4294901760
    %492 = vmatpush1.msra.mxu0 %v491
    %493 = vmatprep.subr.mxu0 0.0
    %v494 = vand.u32 %v122, 4294901760
    %495 = vmatpush1.msra.mxu0 %v494
    %496 = vmatprep.subr.mxu0 0.0
    %v497 = vand.u32 %v121, 4294901760
    %498 = vmatpush1.msra.mxu0 %v497
    %499 = vmatprep.subr.mxu0 0.0
    %v500 = vand.u32 %v120, 4294901760
    %501 = vmatpush1.msra.mxu0 %v500
    %502 = vmatprep.subr.mxu0 0.0
    %v503 = vand.u32 %v119, 4294901760
    %504 = vmatpush1.msra.mxu0 %v503
    %505 = vmatprep.subr.mxu0 0.0
    %v506 = vand.u32 %v118, 4294901760
    %507 = vmatpush1.msra.mxu0 %v506
    %508 = vmatprep.subr.mxu0 0.0
    %v509 = vand.u32 %v117, 4294901760
    %510 = vmatpush1.msra.mxu0 %v509
    %511 = vmatprep.subr.mxu0 0.0
    %v512 = vand.u32 %v116, 4294901760
    %513 = vmatpush1.msra.mxu0 %v512
    %514 = vmatprep.subr.mxu0 0.0
    %v515 = vand.u32 %v115, 4294901760
    %516 = vmatpush1.msra.mxu0 %v515
    %517 = vmatprep.subr.mxu0 0.0
    %v518 = vand.u32 %v114, 4294901760
    %519 = vmatpush1.msra.mxu0 %v518
    %520 = vmatprep.subr.mxu0 0.0
    %v521 = vand.u32 %v113, 4294901760
    %522 = vmatpush1.msra.mxu0 %v521
    %523 = vmatprep.subr.mxu0 0.0
    %524 = vmatpush2.msra.mxu0 0.0
    %525 = vmatprep.subr.mxu0 0.0
    %526 = vmatpush2.msra.mxu0 0.0
    %527 = vmatprep.subr.mxu0 0.0
    %528 = vmatpush2.msra.mxu0 0.0
    %529 = vmatprep.subr.mxu0 0.0
    %530 = vmatpush2.msra.mxu0 0.0
    %531 = vmatprep.subr.mxu0 0.0
    %532 = vmatpush2.msra.mxu0 0.0
    %533 = vmatprep.subr.mxu0 0.0
    %534 = vmatpush2.msra.mxu0 0.0
    %535 = vmatprep.subr.mxu0 0.0
    %536 = vmatpush2.msra.mxu0 0.0
    %537 = vmatprep.subr.mxu0 0.0
    %538 = vmatpush2.msra.mxu0 0.0
    %539 = vmatprep.subr.mxu0 0.0
    %540 = vmatpush2.msra.mxu0 0.0
    %541 = vmatprep.subr.mxu0 0.0
    %542 = vmatpush2.msra.mxu0 0.0
    %543 = vmatprep.subr.mxu0 0.0
    %544 = vmatpush2.msra.mxu0 0.0
    %545 = vmatprep.subr.mxu0 0.0
    %546 = vmatpush2.msra.mxu0 0.0
    %547 = vmatprep.subr.mxu0 0.0
    %548 = vmatpush2.msra.mxu0 0.0
    %549 = vmatprep.subr.mxu0 0.0
    %550 = vmatpush2.msra.mxu0 0.0
    %551 = vmatprep.subr.mxu0 0.0
    %552 = vmatpush2.msra.mxu0 0.0
    %553 = vmatprep.subr.mxu0 0.0
    %554 = vmatpush2.msra.mxu0 0.0
    %555 = vmatprep.mubr.f32.mxu0 0.0
    %v556 = vand.u32 %v23, 4294901760
    %v557 = vsub.f32 %v23, %v556
    %v558 = vand.u32 %v557, 4294901760
    %559 = vmatmul.mubr.f32.gmra.mxu0 %v558
    %v560 = vpop.f32.mrf.mxu0
    %v561 = vadd.f32 %v472, %v560
    %v562 = vpop.f32.mrf.mxu0
    %563 = vdwg.mxu0
    %564 = vmatprep.subr.mxu0 0.0
    %v565 = vand.u32 %v128, 4294901760
    %v566 = vsub.f32 %v128, %v565
    %v567 = vand.u32 %v566, 4294901760
    %568 = vmatpush1.msra.mxu0 %v567
    %569 = vmatprep.subr.mxu0 0.0
    %v570 = vand.u32 %v127, 4294901760
    %v571 = vsub.f32 %v127, %v570
    %v572 = vand.u32 %v571, 4294901760
    %573 = vmatpush1.msra.mxu0 %v572
    %574 = vmatprep.subr.mxu0 0.0
    %v575 = vand.u32 %v126, 4294901760
    %v576 = vsub.f32 %v126, %v575
    %v577 = vand.u32 %v576, 4294901760
    %578 = vmatpush1.msra.mxu0 %v577
    %579 = vmatprep.subr.mxu0 0.0
    %v580 = vand.u32 %v125, 4294901760
    %v581 = vsub.f32 %v125, %v580
    %v582 = vand.u32 %v581, 4294901760
    %583 = vmatpush1.msra.mxu0 %v582
    %584 = vmatprep.subr.mxu0 0.0
    %v585 = vand.u32 %v124, 4294901760
    %v586 = vsub.f32 %v124, %v585
    %v587 = vand.u32 %v586, 4294901760
    %588 = vmatpush1.msra.mxu0 %v587
    %589 = vmatprep.subr.mxu0 0.0
    %v590 = vand.u32 %v123, 4294901760
    %v591 = vsub.f32 %v123, %v590
    %v592 = vand.u32 %v591, 4294901760
    %593 = vmatpush1.msra.mxu0 %v592
    %594 = vmatprep.subr.mxu0 0.0
    %v595 = vand.u32 %v122, 4294901760
    %v596 = vsub.f32 %v122, %v595
    %v597 = vand.u32 %v596, 4294901760
    %598 = vmatpush1.msra.mxu0 %v597
    %599 = vmatprep.subr.mxu0 0.0
    %v600 = vand.u32 %v121, 4294901760
    %v601 = vsub.f32 %v121, %v600
    %v602 = vand.u32 %v601, 4294901760
    %603 = vmatpush1.msra.mxu0 %v602
    %604 = vmatprep.subr.mxu0 0.0
    %v605 = vand.u32 %v120, 4294901760
    %v606 = vsub.f32 %v120, %v605
    %v607 = vand.u32 %v606, 4294901760
    %608 = vmatpush1.msra.mxu0 %v607
    %609 = vmatprep.subr.mxu0 0.0
    %v610 = vand.u32 %v119, 4294901760
    %v611 = vsub.f32 %v119, %v610
    %v612 = vand.u32 %v611, 4294901760
    %613 = vmatpush1.msra.mxu0 %v612
    %614 = vmatprep.subr.mxu0 0.0
    %v615 = vand.u32 %v118, 4294901760
    %v616 = vsub.f32 %v118, %v615
    %v617 = vand.u32 %v616, 4294901760
    %618 = vmatpush1.msra.mxu0 %v617
    %619 = vmatprep.subr.mxu0 0.0
    %v620 = vand.u32 %v117, 4294901760
    %v621 = vsub.f32 %v117, %v620
    %v622 = vand.u32 %v621, 4294901760
    %623 = vmatpush1.msra.mxu0 %v622
    %624 = vmatprep.subr.mxu0 0.0
    %v625 = vand.u32 %v116, 4294901760
    %v626 = vsub.f32 %v116, %v625
    %v627 = vand.u32 %v626, 4294901760
    %628 = vmatpush1.msra.mxu0 %v627
    %629 = vmatprep.subr.mxu0 0.0
    %v630 = vand.u32 %v115, 4294901760
    %v631 = vsub.f32 %v115, %v630
    %v632 = vand.u32 %v631, 4294901760
    %633 = vmatpush1.msra.mxu0 %v632
    %634 = vmatprep.subr.mxu0 0.0
    %v635 = vand.u32 %v114, 4294901760
    %v636 = vsub.f32 %v114, %v635
    %v637 = vand.u32 %v636, 4294901760
    %638 = vmatpush1.msra.mxu0 %v637
    %639 = vmatprep.subr.mxu0 0.0
    %v640 = vand.u32 %v113, 4294901760
    %v641 = vsub.f32 %v113, %v640
    %v642 = vand.u32 %v641, 4294901760
    %643 = vmatpush1.msra.mxu0 %v642
    %644 = vmatprep.subr.mxu0 0.0
    %645 = vmatpush2.msra.mxu0 0.0
    %646 = vmatprep.subr.mxu0 0.0
    %647 = vmatpush2.msra.mxu0 0.0
    %648 = vmatprep.subr.mxu0 0.0
    %649 = vmatpush2.msra.mxu0 0.0
    %650 = vmatprep.subr.mxu0 0.0
    %651 = vmatpush2.msra.mxu0 0.0
    %652 = vmatprep.subr.mxu0 0.0
    %653 = vmatpush2.msra.mxu0 0.0
    %654 = vmatprep.subr.mxu0 0.0
    %655 = vmatpush2.msra.mxu0 0.0
    %656 = vmatprep.subr.mxu0 0.0
    %657 = vmatpush2.msra.mxu0 0.0
    %658 = vmatprep.subr.mxu0 0.0
    %659 = vmatpush2.msra.mxu0 0.0
    %660 = vmatprep.subr.mxu0 0.0
    %661 = vmatpush2.msra.mxu0 0.0
    %662 = vmatprep.subr.mxu0 0.0
    %663 = vmatpush2.msra.mxu0 0.0
    %664 = vmatprep.subr.mxu0 0.0
    %665 = vmatpush2.msra.mxu0 0.0
    %666 = vmatprep.subr.mxu0 0.0
    %667 = vmatpush2.msra.mxu0 0.0
    %668 = vmatprep.subr.mxu0 0.0
    %669 = vmatpush2.msra.mxu0 0.0
    %670 = vmatprep.subr.mxu0 0.0
    %671 = vmatpush2.msra.mxu0 0.0
    %672 = vmatprep.subr.mxu0 0.0
    %673 = vmatpush2.msra.mxu0 0.0
    %674 = vmatprep.subr.mxu0 0.0
    %675 = vmatpush2.msra.mxu0 0.0
    %676 = vmatprep.mubr.f32.mxu0 0.0
    %v677 = vand.u32 %v23, 4294901760
    %678 = vmatmul.mubr.f32.gmra.mxu0 %v677
    %v679 = vpop.f32.mrf.mxu0
    %v680 = vadd.f32 %v561, %v679
    %v681 = vpop.f32.mrf.mxu0
    %682 = vdwg.mxu0
    %683 = vmatprep.subr.mxu0 0.0
    %v684 = vand.u32 %v128, 4294901760
    %685 = vmatpush1.msra.mxu0 %v684
    %686 = vmatprep.subr.mxu0 0.0
    %v687 = vand.u32 %v127, 4294901760
    %688 = vmatpush1.msra.mxu0 %v687
    %689 = vmatprep.subr.mxu0 0.0
    %v690 = vand.u32 %v126, 4294901760
    %691 = vmatpush1.msra.mxu0 %v690
    %692 = vmatprep.subr.mxu0 0.0
    %v693 = vand.u32 %v125, 4294901760
    %694 = vmatpush1.msra.mxu0 %v693
    %695 = vmatprep.subr.mxu0 0.0
    %v696 = vand.u32 %v124, 4294901760
    %697 = vmatpush1.msra.mxu0 %v696
    %698 = vmatprep.subr.mxu0 0.0
    %v699 = vand.u32 %v123, 4294901760
    %700 = vmatpush1.msra.mxu0 %v699
    %701 = vmatprep.subr.mxu0 0.0
    %v702 = vand.u32 %v122, 4294901760
    %703 = vmatpush1.msra.mxu0 %v702
    %704 = vmatprep.subr.mxu0 0.0
    %v705 = vand.u32 %v121, 4294901760
    %706 = vmatpush1.msra.mxu0 %v705
    %707 = vmatprep.subr.mxu0 0.0
    %v708 = vand.u32 %v120, 4294901760
    %709 = vmatpush1.msra.mxu0 %v708
    %710 = vmatprep.subr.mxu0 0.0
    %v711 = vand.u32 %v119, 4294901760
    %712 = vmatpush1.msra.mxu0 %v711
    %713 = vmatprep.subr.mxu0 0.0
    %v714 = vand.u32 %v118, 4294901760
    %715 = vmatpush1.msra.mxu0 %v714
    %716 = vmatprep.subr.mxu0 0.0
    %v717 = vand.u32 %v117, 4294901760
    %718 = vmatpush1.msra.mxu0 %v717
    %719 = vmatprep.subr.mxu0 0.0
    %v720 = vand.u32 %v116, 4294901760
    %721 = vmatpush1.msra.mxu0 %v720
    %722 = vmatprep.subr.mxu0 0.0
    %v723 = vand.u32 %v115, 4294901760
    %724 = vmatpush1.msra.mxu0 %v723
    %725 = vmatprep.subr.mxu0 0.0
    %v726 = vand.u32 %v114, 4294901760
    %727 = vmatpush1.msra.mxu0 %v726
    %728 = vmatprep.subr.mxu0 0.0
    %v729 = vand.u32 %v113, 4294901760
    %730 = vmatpush1.msra.mxu0 %v729
    %731 = vmatprep.subr.mxu0 0.0
    %732 = vmatpush2.msra.mxu0 0.0
    %733 = vmatprep.subr.mxu0 0.0
    %734 = vmatpush2.msra.mxu0 0.0
    %735 = vmatprep.subr.mxu0 0.0
    %736 = vmatpush2.msra.mxu0 0.0
    %737 = vmatprep.subr.mxu0 0.0
    %738 = vmatpush2.msra.mxu0 0.0
    %739 = vmatprep.subr.mxu0 0.0
    %740 = vmatpush2.msra.mxu0 0.0
    %741 = vmatprep.subr.mxu0 0.0
    %742 = vmatpush2.msra.mxu0 0.0
    %743 = vmatprep.subr.mxu0 0.0
    %744 = vmatpush2.msra.mxu0 0.0
    %745 = vmatprep.subr.mxu0 0.0
    %746 = vmatpush2.msra.mxu0 0.0
    %747 = vmatprep.subr.mxu0 0.0
    %748 = vmatpush2.msra.mxu0 0.0
    %749 = vmatprep.subr.mxu0 0.0
    %750 = vmatpush2.msra.mxu0 0.0
    %751 = vmatprep.subr.mxu0 0.0
    %752 = vmatpush2.msra.mxu0 0.0
    %753 = vmatprep.subr.mxu0 0.0
    %754 = vmatpush2.msra.mxu0 0.0
    %755 = vmatprep.subr.mxu0 0.0
    %756 = vmatpush2.msra.mxu0 0.0
    %757 = vmatprep.subr.mxu0 0.0
    %758 = vmatpush2.msra.mxu0 0.0
    %759 = vmatprep.subr.mxu0 0.0
    %760 = vmatpush2.msra.mxu0 0.0
    %761 = vmatprep.subr.mxu0 0.0
    %762 = vmatpush2.msra.mxu0 0.0
    %763 = vmatprep.mubr.f32.mxu0 0.0
    %v764 = vand.u32 %v23, 4294901760
    %765 = vmatmul.mubr.f32.gmra.mxu0 %v764
    %v766 = vpop.f32.mrf.mxu0
    %v767 = vadd.f32 %v680, %v766
    %v768 = vpop.f32.mrf.mxu0
    %769 = vdwg.mxu0
    %770 = vmatprep.subr.mxu0 0.0
    %v771 = vand.u32 %v128, 4294901760
    %772 = vmatpush1.msra.mxu0 %v771
    %773 = vmatprep.subr.mxu0 0.0
    %v774 = vand.u32 %v127, 4294901760
    %775 = vmatpush1.msra.mxu0 %v774
    %776 = vmatprep.subr.mxu0 0.0
    %v777 = vand.u32 %v126, 4294901760
    %778 = vmatpush1.msra.mxu0 %v777
    %779 = vmatprep.subr.mxu0 0.0
    %v780 = vand.u32 %v125, 4294901760
    %781 = vmatpush1.msra.mxu0 %v780
    %782 = vmatprep.subr.mxu0 0.0
    %v783 = vand.u32 %v124, 4294901760
    %784 = vmatpush1.msra.mxu0 %v783
    %785 = vmatprep.subr.mxu0 0.0
    %v786 = vand.u32 %v123, 4294901760
    %787 = vmatpush1.msra.mxu0 %v786
    %788 = vmatprep.subr.mxu0 0.0
    %v789 = vand.u32 %v122, 4294901760
    %790 = vmatpush1.msra.mxu0 %v789
    %791 = vmatprep.subr.mxu0 0.0
    %v792 = vand.u32 %v121, 4294901760
    %793 = vmatpush1.msra.mxu0 %v792
    %794 = vmatprep.subr.mxu0 0.0
    %v795 = vand.u32 %v120, 4294901760
    %796 = vmatpush1.msra.mxu0 %v795
    %797 = vmatprep.subr.mxu0 0.0
    %v798 = vand.u32 %v119, 4294901760
    %799 = vmatpush1.msra.mxu0 %v798
    %800 = vmatprep.subr.mxu0 0.0
    %v801 = vand.u32 %v118, 4294901760
    %802 = vmatpush1.msra.mxu0 %v801
    %803 = vmatprep.subr.mxu0 0.0
    %v804 = vand.u32 %v117, 4294901760
    %805 = vmatpush1.msra.mxu0 %v804
    %806 = vmatprep.subr.mxu0 0.0
    %v807 = vand.u32 %v116, 4294901760
    %808 = vmatpush1.msra.mxu0 %v807
    %809 = vmatprep.subr.mxu0 0.0
    %v810 = vand.u32 %v115, 4294901760
    %811 = vmatpush1.msra.mxu0 %v810
    %812 = vmatprep.subr.mxu0 0.0
    %v813 = vand.u32 %v114, 4294901760
    %814 = vmatpush1.msra.mxu0 %v813
    %815 = vmatprep.subr.mxu0 0.0
    %v816 = vand.u32 %v113, 4294901760
    %817 = vmatpush1.msra.mxu0 %v816
    %818 = vmatprep.subr.mxu0 0.0
    %819 = vmatpush2.msra.mxu0 0.0
    %820 = vmatprep.subr.mxu0 0.0
    %821 = vmatpush2.msra.mxu0 0.0
    %822 = vmatprep.subr.mxu0 0.0
    %823 = vmatpush2.msra.mxu0 0.0
    %824 = vmatprep.subr.mxu0 0.0
    %825 = vmatpush2.msra.mxu0 0.0
    %826 = vmatprep.subr.mxu0 0.0
    %827 = vmatpush2.msra.mxu0 0.0
    %828 = vmatprep.subr.mxu0 0.0
    %829 = vmatpush2.msra.mxu0 0.0
    %830 = vmatprep.subr.mxu0 0.0
    %831 = vmatpush2.msra.mxu0 0.0
    %832 = vmatprep.subr.mxu0 0.0
    %833 = vmatpush2.msra.mxu0 0.0
    %834 = vmatprep.subr.mxu0 0.0
    %835 = vmatpush2.msra.mxu0 0.0
    %836 = vmatprep.subr.mxu0 0.0
    %837 = vmatpush2.msra.mxu0 0.0
    %838 = vmatprep.subr.mxu0 0.0
    %839 = vmatpush2.msra.mxu0 0.0
    %840 = vmatprep.subr.mxu0 0.0
    %841 = vmatpush2.msra.mxu0 0.0
    %842 = vmatprep.subr.mxu0 0.0
    %843 = vmatpush2.msra.mxu0 0.0
    %844 = vmatprep.subr.mxu0 0.0
    %845 = vmatpush2.msra.mxu0 0.0
    %846 = vmatprep.subr.mxu0 0.0
    %847 = vmatpush2.msra.mxu0 0.0
    %848 = vmatprep.subr.mxu0 0.0
    %849 = vmatpush2.msra.mxu0 0.0
    %850 = vmatprep.mubr.f32.mxu0 0.0
    %v851 = vand.u32 %v26, 4294901760
    %v852 = vsub.f32 %v26, %v851
    %v853 = vand.u32 %v852, 4294901760
    %v854 = vsub.f32 %v852, %v853
    %v855 = vand.u32 %v854, 4294901760
    %856 = vmatmul.mubr.f32.gmra.mxu0 %v855
    %v857 = vpop.f32.mrf.mxu0
    %v858 = vadd.f32 0.0, %v857
    %v859 = vpop.f32.mrf.mxu0
    %860 = vdwg.mxu0
    %861 = vmatprep.subr.mxu0 0.0
    %v862 = vand.u32 %v128, 4294901760
    %v863 = vsub.f32 %v128, %v862
    %v864 = vand.u32 %v863, 4294901760
    %v865 = vsub.f32 %v863, %v864
    %v866 = vand.u32 %v865, 4294901760
    %867 = vmatpush1.msra.mxu0 %v866
    %868 = vmatprep.subr.mxu0 0.0
    %v869 = vand.u32 %v127, 4294901760
    %v870 = vsub.f32 %v127, %v869
    %v871 = vand.u32 %v870, 4294901760
    %v872 = vsub.f32 %v870, %v871
    %v873 = vand.u32 %v872, 4294901760
    %874 = vmatpush1.msra.mxu0 %v873
    %875 = vmatprep.subr.mxu0 0.0
    %v876 = vand.u32 %v126, 4294901760
    %v877 = vsub.f32 %v126, %v876
    %v878 = vand.u32 %v877, 4294901760
    %v879 = vsub.f32 %v877, %v878
    %v880 = vand.u32 %v879, 4294901760
    %881 = vmatpush1.msra.mxu0 %v880
    %882 = vmatprep.subr.mxu0 0.0
    %v883 = vand.u32 %v125, 4294901760
    %v884 = vsub.f32 %v125, %v883
    %v885 = vand.u32 %v884, 4294901760
    %v886 = vsub.f32 %v884, %v885
    %v887 = vand.u32 %v886, 4294901760
    %888 = vmatpush1.msra.mxu0 %v887
    %889 = vmatprep.subr.mxu0 0.0
    %v890 = vand.u32 %v124, 4294901760
    %v891 = vsub.f32 %v124, %v890
    %v892 = vand.u32 %v891, 4294901760
    %v893 = vsub.f32 %v891, %v892
    %v894 = vand.u32 %v893, 4294901760
    %895 = vmatpush1.msra.mxu0 %v894
    %896 = vmatprep.subr.mxu0 0.0
    %v897 = vand.u32 %v123, 4294901760
    %v898 = vsub.f32 %v123, %v897
    %v899 = vand.u32 %v898, 4294901760
    %v900 = vsub.f32 %v898, %v899
    %v901 = vand.u32 %v900, 4294901760
    %902 = vmatpush1.msra.mxu0 %v901
    %903 = vmatprep.subr.mxu0 0.0
    %v904 = vand.u32 %v122, 4294901760
    %v905 = vsub.f32 %v122, %v904
    %v906 = vand.u32 %v905, 4294901760
    %v907 = vsub.f32 %v905, %v906
    %v908 = vand.u32 %v907, 4294901760
    %909 = vmatpush1.msra.mxu0 %v908
    %910 = vmatprep.subr.mxu0 0.0
    %v911 = vand.u32 %v121, 4294901760
    %v912 = vsub.f32 %v121, %v911
    %v913 = vand.u32 %v912, 4294901760
    %v914 = vsub.f32 %v912, %v913
    %v915 = vand.u32 %v914, 4294901760
    %916 = vmatpush1.msra.mxu0 %v915
    %917 = vmatprep.subr.mxu0 0.0
    %v918 = vand.u32 %v120, 4294901760
    %v919 = vsub.f32 %v120, %v918
    %v920 = vand.u32 %v919, 4294901760
    %v921 = vsub.f32 %v919, %v920
    %v922 = vand.u32 %v921, 4294901760
    %923 = vmatpush1.msra.mxu0 %v922
    %924 = vmatprep.subr.mxu0 0.0
    %v925 = vand.u32 %v119, 4294901760
    %v926 = vsub.f32 %v119, %v925
    %v927 = vand.u32 %v926, 4294901760
    %v928 = vsub.f32 %v926, %v927
    %v929 = vand.u32 %v928, 4294901760
    %930 = vmatpush1.msra.mxu0 %v929
    %931 = vmatprep.subr.mxu0 0.0
    %v932 = vand.u32 %v118, 4294901760
    %v933 = vsub.f32 %v118, %v932
    %v934 = vand.u32 %v933, 4294901760
    %v935 = vsub.f32 %v933, %v934
    %v936 = vand.u32 %v935, 4294901760
    %937 = vmatpush1.msra.mxu0 %v936
    %938 = vmatprep.subr.mxu0 0.0
    %v939 = vand.u32 %v117, 4294901760
    %v940 = vsub.f32 %v117, %v939
    %v941 = vand.u32 %v940, 4294901760
    %v942 = vsub.f32 %v940, %v941
    %v943 = vand.u32 %v942, 4294901760
    %944 = vmatpush1.msra.mxu0 %v943
    %945 = vmatprep.subr.mxu0 0.0
    %v946 = vand.u32 %v116, 4294901760
    %v947 = vsub.f32 %v116, %v946
    %v948 = vand.u32 %v947, 4294901760
    %v949 = vsub.f32 %v947, %v948
    %v950 = vand.u32 %v949, 4294901760
    %951 = vmatpush1.msra.mxu0 %v950
    %952 = vmatprep.subr.mxu0 0.0
    %v953 = vand.u32 %v115, 4294901760
    %v954 = vsub.f32 %v115, %v953
    %v955 = vand.u32 %v954, 4294901760
    %v956 = vsub.f32 %v954, %v955
    %v957 = vand.u32 %v956, 4294901760
    %958 = vmatpush1.msra.mxu0 %v957
    %959 = vmatprep.subr.mxu0 0.0
    %v960 = vand.u32 %v114, 4294901760
    %v961 = vsub.f32 %v114, %v960
    %v962 = vand.u32 %v961, 4294901760
    %v963 = vsub.f32 %v961, %v962
    %v964 = vand.u32 %v963, 4294901760
    %965 = vmatpush1.msra.mxu0 %v964
    %966 = vmatprep.subr.mxu0 0.0
    %v967 = vand.u32 %v113, 4294901760
    %v968 = vsub.f32 %v113, %v967
    %v969 = vand.u32 %v968, 4294901760
    %v970 = vsub.f32 %v968, %v969
    %v971 = vand.u32 %v970, 4294901760
    %972 = vmatpush1.msra.mxu0 %v971
    %973 = vmatprep.subr.mxu0 0.0
    %974 = vmatpush2.msra.mxu0 0.0
    %975 = vmatprep.subr.mxu0 0.0
    %976 = vmatpush2.msra.mxu0 0.0
    %977 = vmatprep.subr.mxu0 0.0
    %978 = vmatpush2.msra.mxu0 0.0
    %979 = vmatprep.subr.mxu0 0.0
    %980 = vmatpush2.msra.mxu0 0.0
    %981 = vmatprep.subr.mxu0 0.0
    %982 = vmatpush2.msra.mxu0 0.0
    %983 = vmatprep.subr.mxu0 0.0
    %984 = vmatpush2.msra.mxu0 0.0
    %985 = vmatprep.subr.mxu0 0.0
    %986 = vmatpush2.msra.mxu0 0.0
    %987 = vmatprep.subr.mxu0 0.0
    %988 = vmatpush2.msra.mxu0 0.0
    %989 = vmatprep.subr.mxu0 0.0
    %990 = vmatpush2.msra.mxu0 0.0
    %991 = vmatprep.subr.mxu0 0.0
    %992 = vmatpush2.msra.mxu0 0.0
    %993 = vmatprep.subr.mxu0 0.0
    %994 = vmatpush2.msra.mxu0 0.0
    %995 = vmatprep.subr.mxu0 0.0
    %996 = vmatpush2.msra.mxu0 0.0
    %997 = vmatprep.subr.mxu0 0.0
    %998 = vmatpush2.msra.mxu0 0.0
    %999 = vmatprep.subr.mxu0 0.0
    %1000 = vmatpush2.msra.mxu0 0.0
    %1001 = vmatprep.subr.mxu0 0.0
    %1002 = vmatpush2.msra.mxu0 0.0
    %1003 = vmatprep.subr.mxu0 0.0
    %1004 = vmatpush2.msra.mxu0 0.0
    %1005 = vmatprep.mubr.f32.mxu0 0.0
    %v1006 = vand.u32 %v26, 4294901760
    %1007 = vmatmul.mubr.f32.gmra.mxu0 %v1006
    %v1008 = vpop.f32.mrf.mxu0
    %v1009 = vadd.f32 %v858, %v1008
    %v1010 = vpop.f32.mrf.mxu0
    %1011 = vdwg.mxu0
    %1012 = vmatprep.subr.mxu0 0.0
    %v1013 = vand.u32 %v128, 4294901760
    %v1014 = vsub.f32 %v128, %v1013
    %1015 = vmatpush1.msra.mxu0 %v1014
    %1016 = vmatprep.subr.mxu0 0.0
    %v1017 = vand.u32 %v127, 4294901760
    %v1018 = vsub.f32 %v127, %v1017
    %1019 = vmatpush1.msra.mxu0 %v1018
    %1020 = vmatprep.subr.mxu0 0.0
    %v1021 = vand.u32 %v126, 4294901760
    %v1022 = vsub.f32 %v126, %v1021
    %1023 = vmatpush1.msra.mxu0 %v1022
    %1024 = vmatprep.subr.mxu0 0.0
    %v1025 = vand.u32 %v125, 4294901760
    %v1026 = vsub.f32 %v125, %v1025
    %1027 = vmatpush1.msra.mxu0 %v1026
    %1028 = vmatprep.subr.mxu0 0.0
    %v1029 = vand.u32 %v124, 4294901760
    %v1030 = vsub.f32 %v124, %v1029
    %1031 = vmatpush1.msra.mxu0 %v1030
    %1032 = vmatprep.subr.mxu0 0.0
    %v1033 = vand.u32 %v123, 4294901760
    %v1034 = vsub.f32 %v123, %v1033
    %1035 = vmatpush1.msra.mxu0 %v1034
    %1036 = vmatprep.subr.mxu0 0.0
    %v1037 = vand.u32 %v122, 4294901760
    %v1038 = vsub.f32 %v122, %v1037
    %1039 = vmatpush1.msra.mxu0 %v1038
    %1040 = vmatprep.subr.mxu0 0.0
    %v1041 = vand.u32 %v121, 4294901760
    %v1042 = vsub.f32 %v121, %v1041
    %1043 = vmatpush1.msra.mxu0 %v1042
    %1044 = vmatprep.subr.mxu0 0.0
    %v1045 = vand.u32 %v120, 4294901760
    %v1046 = vsub.f32 %v120, %v1045
    %1047 = vmatpush1.msra.mxu0 %v1046
    %1048 = vmatprep.subr.mxu0 0.0
    %v1049 = vand.u32 %v119, 4294901760
    %v1050 = vsub.f32 %v119, %v1049
    %1051 = vmatpush1.msra.mxu0 %v1050
    %1052 = vmatprep.subr.mxu0 0.0
    %v1053 = vand.u32 %v118, 4294901760
    %v1054 = vsub.f32 %v118, %v1053
    %1055 = vmatpush1.msra.mxu0 %v1054
    %1056 = vmatprep.subr.mxu0 0.0
    %v1057 = vand.u32 %v117, 4294901760
    %v1058 = vsub.f32 %v117, %v1057
    %1059 = vmatpush1.msra.mxu0 %v1058
    %1060 = vmatprep.subr.mxu0 0.0
    %v1061 = vand.u32 %v116, 4294901760
    %v1062 = vsub.f32 %v116, %v1061
    %1063 = vmatpush1.msra.mxu0 %v1062
    %1064 = vmatprep.subr.mxu0 0.0
    %v1065 = vand.u32 %v115, 4294901760
    %v1066 = vsub.f32 %v115, %v1065
    %1067 = vmatpush1.msra.mxu0 %v1066
    %1068 = vmatprep.subr.mxu0 0.0
    %v1069 = vand.u32 %v114, 4294901760
    %v1070 = vsub.f32 %v114, %v1069
    %1071 = vmatpush1.msra.mxu0 %v1070
    %1072 = vmatprep.subr.mxu0 0.0
    %v1073 = vand.u32 %v113, 4294901760
    %v1074 = vsub.f32 %v113, %v1073
    %1075 = vmatpush1.msra.mxu0 %v1074
    %1076 = vmatprep.subr.mxu0 0.0
    %1077 = vmatpush2.msra.mxu0 0.0
    %1078 = vmatprep.subr.mxu0 0.0
    %1079 = vmatpush2.msra.mxu0 0.0
    %1080 = vmatprep.subr.mxu0 0.0
    %1081 = vmatpush2.msra.mxu0 0.0
    %1082 = vmatprep.subr.mxu0 0.0
    %1083 = vmatpush2.msra.mxu0 0.0
    %1084 = vmatprep.subr.mxu0 0.0
    %1085 = vmatpush2.msra.mxu0 0.0
    %1086 = vmatprep.subr.mxu0 0.0
    %1087 = vmatpush2.msra.mxu0 0.0
    %1088 = vmatprep.subr.mxu0 0.0
    %1089 = vmatpush2.msra.mxu0 0.0
    %1090 = vmatprep.subr.mxu0 0.0
    %1091 = vmatpush2.msra.mxu0 0.0
    %1092 = vmatprep.subr.mxu0 0.0
    %1093 = vmatpush2.msra.mxu0 0.0
    %1094 = vmatprep.subr.mxu0 0.0
    %1095 = vmatpush2.msra.mxu0 0.0
    %1096 = vmatprep.subr.mxu0 0.0
    %1097 = vmatpush2.msra.mxu0 0.0
    %1098 = vmatprep.subr.mxu0 0.0
    %1099 = vmatpush2.msra.mxu0 0.0
    %1100 = vmatprep.subr.mxu0 0.0
    %1101 = vmatpush2.msra.mxu0 0.0
    %1102 = vmatprep.subr.mxu0 0.0
    %1103 = vmatpush2.msra.mxu0 0.0
    %1104 = vmatprep.subr.mxu0 0.0
    %1105 = vmatpush2.msra.mxu0 0.0
    %1106 = vmatprep.subr.mxu0 0.0
    %1107 = vmatpush2.msra.mxu0 0.0
    %1108 = vmatprep.mubr.f32.mxu0 0.0
    %v1109 = vand.u32 %v26, 4294901760
    %v1110 = vsub.f32 %v26, %v1109
    %1111 = vmatmul.mubr.f32.gmra.mxu0 %v1110
    %v1112 = vpop.f32.mrf.mxu0
    %v1113 = vadd.f32 %v1009, %v1112
    %v1114 = vpop.f32.mrf.mxu0
    %1115 = vdwg.mxu0
    %1116 = vmatprep.subr.mxu0 0.0
    %v1117 = vand.u32 %v128, 4294901760
    %1118 = vmatpush1.msra.mxu0 %v1117
    %1119 = vmatprep.subr.mxu0 0.0
    %v1120 = vand.u32 %v127, 4294901760
    %1121 = vmatpush1.msra.mxu0 %v1120
    %1122 = vmatprep.subr.mxu0 0.0
    %v1123 = vand.u32 %v126, 4294901760
    %1124 = vmatpush1.msra.mxu0 %v1123
    %1125 = vmatprep.subr.mxu0 0.0
    %v1126 = vand.u32 %v125, 4294901760
    %1127 = vmatpush1.msra.mxu0 %v1126
    %1128 = vmatprep.subr.mxu0 0.0
    %v1129 = vand.u32 %v124, 4294901760
    %1130 = vmatpush1.msra.mxu0 %v1129
    %1131 = vmatprep.subr.mxu0 0.0
    %v1132 = vand.u32 %v123, 4294901760
    %1133 = vmatpush1.msra.mxu0 %v1132
    %1134 = vmatprep.subr.mxu0 0.0
    %v1135 = vand.u32 %v122, 4294901760
    %1136 = vmatpush1.msra.mxu0 %v1135
    %1137 = vmatprep.subr.mxu0 0.0
    %v1138 = vand.u32 %v121, 4294901760
    %1139 = vmatpush1.msra.mxu0 %v1138
    %1140 = vmatprep.subr.mxu0 0.0
    %v1141 = vand.u32 %v120, 4294901760
    %1142 = vmatpush1.msra.mxu0 %v1141
    %1143 = vmatprep.subr.mxu0 0.0
    %v1144 = vand.u32 %v119, 4294901760
    %1145 = vmatpush1.msra.mxu0 %v1144
    %1146 = vmatprep.subr.mxu0 0.0
    %v1147 = vand.u32 %v118, 4294901760
    %1148 = vmatpush1.msra.mxu0 %v1147
    %1149 = vmatprep.subr.mxu0 0.0
    %v1150 = vand.u32 %v117, 4294901760
    %1151 = vmatpush1.msra.mxu0 %v1150
    %1152 = vmatprep.subr.mxu0 0.0
    %v1153 = vand.u32 %v116, 4294901760
    %1154 = vmatpush1.msra.mxu0 %v1153
    %1155 = vmatprep.subr.mxu0 0.0
    %v1156 = vand.u32 %v115, 4294901760
    %1157 = vmatpush1.msra.mxu0 %v1156
    %1158 = vmatprep.subr.mxu0 0.0
    %v1159 = vand.u32 %v114, 4294901760
    %1160 = vmatpush1.msra.mxu0 %v1159
    %1161 = vmatprep.subr.mxu0 0.0
    %v1162 = vand.u32 %v113, 4294901760
    %1163 = vmatpush1.msra.mxu0 %v1162
    %1164 = vmatprep.subr.mxu0 0.0
    %1165 = vmatpush2.msra.mxu0 0.0
    %1166 = vmatprep.subr.mxu0 0.0
    %1167 = vmatpush2.msra.mxu0 0.0
    %1168 = vmatprep.subr.mxu0 0.0
    %1169 = vmatpush2.msra.mxu0 0.0
    %1170 = vmatprep.subr.mxu0 0.0
    %1171 = vmatpush2.msra.mxu0 0.0
    %1172 = vmatprep.subr.mxu0 0.0
    %1173 = vmatpush2.msra.mxu0 0.0
    %1174 = vmatprep.subr.mxu0 0.0
    %1175 = vmatpush2.msra.mxu0 0.0
    %1176 = vmatprep.subr.mxu0 0.0
    %1177 = vmatpush2.msra.mxu0 0.0
    %1178 = vmatprep.subr.mxu0 0.0
    %1179 = vmatpush2.msra.mxu0 0.0
    %1180 = vmatprep.subr.mxu0 0.0
    %1181 = vmatpush2.msra.mxu0 0.0
    %1182 = vmatprep.subr.mxu0 0.0
    %1183 = vmatpush2.msra.mxu0 0.0
    %1184 = vmatprep.subr.mxu0 0.0
    %1185 = vmatpush2.msra.mxu0 0.0
    %1186 = vmatprep.subr.mxu0 0.0
    %1187 = vmatpush2.msra.mxu0 0.0
    %1188 = vmatprep.subr.mxu0 0.0
    %1189 = vmatpush2.msra.mxu0 0.0
    %1190 = vmatprep.subr.mxu0 0.0
    %1191 = vmatpush2.msra.mxu0 0.0
    %1192 = vmatprep.subr.mxu0 0.0
    %1193 = vmatpush2.msra.mxu0 0.0
    %1194 = vmatprep.subr.mxu0 0.0
    %1195 = vmatpush2.msra.mxu0 0.0
    %1196 = vmatprep.mubr.f32.mxu0 0.0
    %v1197 = vand.u32 %v26, 4294901760
    %v1198 = vsub.f32 %v26, %v1197
    %v1199 = vand.u32 %v1198, 4294901760
    %1200 = vmatmul.mubr.f32.gmra.mxu0 %v1199
    %v1201 = vpop.f32.mrf.mxu0
    %v1202 = vadd.f32 %v1113, %v1201
    %v1203 = vpop.f32.mrf.mxu0
    %1204 = vdwg.mxu0
    %1205 = vmatprep.subr.mxu0 0.0
    %v1206 = vand.u32 %v128, 4294901760
    %v1207 = vsub.f32 %v128, %v1206
    %v1208 = vand.u32 %v1207, 4294901760
    %1209 = vmatpush1.msra.mxu0 %v1208
    %1210 = vmatprep.subr.mxu0 0.0
    %v1211 = vand.u32 %v127, 4294901760
    %v1212 = vsub.f32 %v127, %v1211
    %v1213 = vand.u32 %v1212, 4294901760
    %1214 = vmatpush1.msra.mxu0 %v1213
    %1215 = vmatprep.subr.mxu0 0.0
    %v1216 = vand.u32 %v126, 4294901760
    %v1217 = vsub.f32 %v126, %v1216
    %v1218 = vand.u32 %v1217, 4294901760
    %1219 = vmatpush1.msra.mxu0 %v1218
    %1220 = vmatprep.subr.mxu0 0.0
    %v1221 = vand.u32 %v125, 4294901760
    %v1222 = vsub.f32 %v125, %v1221
    %v1223 = vand.u32 %v1222, 4294901760
    %1224 = vmatpush1.msra.mxu0 %v1223
    %1225 = vmatprep.subr.mxu0 0.0
    %v1226 = vand.u32 %v124, 4294901760
    %v1227 = vsub.f32 %v124, %v1226
    %v1228 = vand.u32 %v1227, 4294901760
    %1229 = vmatpush1.msra.mxu0 %v1228
    %1230 = vmatprep.subr.mxu0 0.0
    %v1231 = vand.u32 %v123, 4294901760
    %v1232 = vsub.f32 %v123, %v1231
    %v1233 = vand.u32 %v1232, 4294901760
    %1234 = vmatpush1.msra.mxu0 %v1233
    %1235 = vmatprep.subr.mxu0 0.0
    %v1236 = vand.u32 %v122, 4294901760
    %v1237 = vsub.f32 %v122, %v1236
    %v1238 = vand.u32 %v1237, 4294901760
    %1239 = vmatpush1.msra.mxu0 %v1238
    %1240 = vmatprep.subr.mxu0 0.0
    %v1241 = vand.u32 %v121, 4294901760
    %v1242 = vsub.f32 %v121, %v1241
    %v1243 = vand.u32 %v1242, 4294901760
    %1244 = vmatpush1.msra.mxu0 %v1243
    %1245 = vmatprep.subr.mxu0 0.0
    %v1246 = vand.u32 %v120, 4294901760
    %v1247 = vsub.f32 %v120, %v1246
    %v1248 = vand.u32 %v1247, 4294901760
    %1249 = vmatpush1.msra.mxu0 %v1248
    %1250 = vmatprep.subr.mxu0 0.0
    %v1251 = vand.u32 %v119, 4294901760
    %v1252 = vsub.f32 %v119, %v1251
    %v1253 = vand.u32 %v1252, 4294901760
    %1254 = vmatpush1.msra.mxu0 %v1253
    %1255 = vmatprep.subr.mxu0 0.0
    %v1256 = vand.u32 %v118, 4294901760
    %v1257 = vsub.f32 %v118, %v1256
    %v1258 = vand.u32 %v1257, 4294901760
    %1259 = vmatpush1.msra.mxu0 %v1258
    %1260 = vmatprep.subr.mxu0 0.0
    %v1261 = vand.u32 %v117, 4294901760
    %v1262 = vsub.f32 %v117, %v1261
    %v1263 = vand.u32 %v1262, 4294901760
    %1264 = vmatpush1.msra.mxu0 %v1263
    %1265 = vmatprep.subr.mxu0 0.0
    %v1266 = vand.u32 %v116, 4294901760
    %v1267 = vsub.f32 %v116, %v1266
    %v1268 = vand.u32 %v1267, 4294901760
    %1269 = vmatpush1.msra.mxu0 %v1268
    %1270 = vmatprep.subr.mxu0 0.0
    %v1271 = vand.u32 %v115, 4294901760
    %v1272 = vsub.f32 %v115, %v1271
    %v1273 = vand.u32 %v1272, 4294901760
    %1274 = vmatpush1.msra.mxu0 %v1273
    %1275 = vmatprep.subr.mxu0 0.0
    %v1276 = vand.u32 %v114, 4294901760
    %v1277 = vsub.f32 %v114, %v1276
    %v1278 = vand.u32 %v1277, 4294901760
    %1279 = vmatpush1.msra.mxu0 %v1278
    %1280 = vmatprep.subr.mxu0 0.0
    %v1281 = vand.u32 %v113, 4294901760
    %v1282 = vsub.f32 %v113, %v1281
    %v1283 = vand.u32 %v1282, 4294901760
    %1284 = vmatpush1.msra.mxu0 %v1283
    %1285 = vmatprep.subr.mxu0 0.0
    %1286 = vmatpush2.msra.mxu0 0.0
    %1287 = vmatprep.subr.mxu0 0.0
    %1288 = vmatpush2.msra.mxu0 0.0
    %1289 = vmatprep.subr.mxu0 0.0
    %1290 = vmatpush2.msra.mxu0 0.0
    %1291 = vmatprep.subr.mxu0 0.0
    %1292 = vmatpush2.msra.mxu0 0.0
    %1293 = vmatprep.subr.mxu0 0.0
    %1294 = vmatpush2.msra.mxu0 0.0
    %1295 = vmatprep.subr.mxu0 0.0
    %1296 = vmatpush2.msra.mxu0 0.0
    %1297 = vmatprep.subr.mxu0 0.0
    %1298 = vmatpush2.msra.mxu0 0.0
    %1299 = vmatprep.subr.mxu0 0.0
    %1300 = vmatpush2.msra.mxu0 0.0
    %1301 = vmatprep.subr.mxu0 0.0
    %1302 = vmatpush2.msra.mxu0 0.0
    %1303 = vmatprep.subr.mxu0 0.0
    %1304 = vmatpush2.msra.mxu0 0.0
    %1305 = vmatprep.subr.mxu0 0.0
    %1306 = vmatpush2.msra.mxu0 0.0
    %1307 = vmatprep.subr.mxu0 0.0
    %1308 = vmatpush2.msra.mxu0 0.0
    %1309 = vmatprep.subr.mxu0 0.0
    %1310 = vmatpush2.msra.mxu0 0.0
    %1311 = vmatprep.subr.mxu0 0.0
    %1312 = vmatpush2.msra.mxu0 0.0
    %1313 = vmatprep.subr.mxu0 0.0
    %1314 = vmatpush2.msra.mxu0 0.0
    %1315 = vmatprep.subr.mxu0 0.0
    %1316 = vmatpush2.msra.mxu0 0.0
    %1317 = vmatprep.mubr.f32.mxu0 0.0
    %v1318 = vand.u32 %v26, 4294901760
    %1319 = vmatmul.mubr.f32.gmra.mxu0 %v1318
    %v1320 = vpop.f32.mrf.mxu0
    %v1321 = vadd.f32 %v1202, %v1320
    %v1322 = vpop.f32.mrf.mxu0
    %1323 = vdwg.mxu0
    %1324 = vmatprep.subr.mxu0 0.0
    %v1325 = vand.u32 %v128, 4294901760
    %1326 = vmatpush1.msra.mxu0 %v1325
    %1327 = vmatprep.subr.mxu0 0.0
    %v1328 = vand.u32 %v127, 4294901760
    %1329 = vmatpush1.msra.mxu0 %v1328
    %1330 = vmatprep.subr.mxu0 0.0
    %v1331 = vand.u32 %v126, 4294901760
    %1332 = vmatpush1.msra.mxu0 %v1331
    %1333 = vmatprep.subr.mxu0 0.0
    %v1334 = vand.u32 %v125, 4294901760
    %1335 = vmatpush1.msra.mxu0 %v1334
    %1336 = vmatprep.subr.mxu0 0.0
    %v1337 = vand.u32 %v124, 4294901760
    %1338 = vmatpush1.msra.mxu0 %v1337
    %1339 = vmatprep.subr.mxu0 0.0
    %v1340 = vand.u32 %v123, 4294901760
    %1341 = vmatpush1.msra.mxu0 %v1340
    %1342 = vmatprep.subr.mxu0 0.0
    %v1343 = vand.u32 %v122, 4294901760
    %1344 = vmatpush1.msra.mxu0 %v1343
    %1345 = vmatprep.subr.mxu0 0.0
    %v1346 = vand.u32 %v121, 4294901760
    %1347 = vmatpush1.msra.mxu0 %v1346
    %1348 = vmatprep.subr.mxu0 0.0
    %v1349 = vand.u32 %v120, 4294901760
    %1350 = vmatpush1.msra.mxu0 %v1349
    %1351 = vmatprep.subr.mxu0 0.0
    %v1352 = vand.u32 %v119, 4294901760
    %1353 = vmatpush1.msra.mxu0 %v1352
    %1354 = vmatprep.subr.mxu0 0.0
    %v1355 = vand.u32 %v118, 4294901760
    %1356 = vmatpush1.msra.mxu0 %v1355
    %1357 = vmatprep.subr.mxu0 0.0
    %v1358 = vand.u32 %v117, 4294901760
    %1359 = vmatpush1.msra.mxu0 %v1358
    %1360 = vmatprep.subr.mxu0 0.0
    %v1361 = vand.u32 %v116, 4294901760
    %1362 = vmatpush1.msra.mxu0 %v1361
    %1363 = vmatprep.subr.mxu0 0.0
    %v1364 = vand.u32 %v115, 4294901760
    %1365 = vmatpush1.msra.mxu0 %v1364
    %1366 = vmatprep.subr.mxu0 0.0
    %v1367 = vand.u32 %v114, 4294901760
    %1368 = vmatpush1.msra.mxu0 %v1367
    %1369 = vmatprep.subr.mxu0 0.0
    %v1370 = vand.u32 %v113, 4294901760
    %1371 = vmatpush1.msra.mxu0 %v1370
    %1372 = vmatprep.subr.mxu0 0.0
    %1373 = vmatpush2.msra.mxu0 0.0
    %1374 = vmatprep.subr.mxu0 0.0
    %1375 = vmatpush2.msra.mxu0 0.0
    %1376 = vmatprep.subr.mxu0 0.0
    %1377 = vmatpush2.msra.mxu0 0.0
    %1378 = vmatprep.subr.mxu0 0.0
    %1379 = vmatpush2.msra.mxu0 0.0
    %1380 = vmatprep.subr.mxu0 0.0
    %1381 = vmatpush2.msra.mxu0 0.0
    %1382 = vmatprep.subr.mxu0 0.0
    %1383 = vmatpush2.msra.mxu0 0.0
    %1384 = vmatprep.subr.mxu0 0.0
    %1385 = vmatpush2.msra.mxu0 0.0
    %1386 = vmatprep.subr.mxu0 0.0
    %1387 = vmatpush2.msra.mxu0 0.0
    %1388 = vmatprep.subr.mxu0 0.0
    %1389 = vmatpush2.msra.mxu0 0.0
    %1390 = vmatprep.subr.mxu0 0.0
    %1391 = vmatpush2.msra.mxu0 0.0
    %1392 = vmatprep.subr.mxu0 0.0
    %1393 = vmatpush2.msra.mxu0 0.0
    %1394 = vmatprep.subr.mxu0 0.0
    %1395 = vmatpush2.msra.mxu0 0.0
    %1396 = vmatprep.subr.mxu0 0.0
    %1397 = vmatpush2.msra.mxu0 0.0
    %1398 = vmatprep.subr.mxu0 0.0
    %1399 = vmatpush2.msra.mxu0 0.0
    %1400 = vmatprep.subr.mxu0 0.0
    %1401 = vmatpush2.msra.mxu0 0.0
    %1402 = vmatprep.subr.mxu0 0.0
    %1403 = vmatpush2.msra.mxu0 0.0
    %1404 = vmatprep.mubr.f32.mxu0 0.0
    %v1405 = vand.u32 %v26, 4294901760
    %1406 = vmatmul.mubr.f32.gmra.mxu0 %v1405
    %v1407 = vpop.f32.mrf.mxu0
    %v1408 = vadd.f32 %v1321, %v1407
    %v1409 = vpop.f32.mrf.mxu0
    %1410 = vdwg.mxu0
    %v1411 = vrcp.pop %v1408
    %v1412 = vmul.f32 %v767, %v1411
    %vm1413 = vcmask 58368
    %1414 = vst.msk [vmem:[#allocation5] sm:$0x3] %vm1413, %v1412
    // Predicated region
    $region10: #{tpu_custom_call.1} parent=1 // pred_check
      _
    $region11: #{tpu_custom_call.1} parent=1 // pred_check_branch
      %1416 = sbr.rel (0) target = $region13
    $region12: #{tpu_custom_call.1} parent=1 // pred_region
      %s1418 = ssub.s32 32, 32
      %1419 = vsyncadd [#allocation4], %s1418
      %s1421 = sshll.u32 [#allocation5], 4
      %s1422 = int_to_ptr.vmem [resolvable:$true] %s1421
      %1424 = dma.vmem_to_hbm [thread:$0]  %s1422, 32, %s1, [#allocation4]
    $region13: #{tpu_custom_call.1} parent=1 // pred_fallthru
      _
    // Predicated region
    $region14: #{tpu_custom_call.1} parent=1 // pred_check
      _
    $region15: #{tpu_custom_call.1} parent=1 // pred_check_branch
      %1426 = sbr.rel (0) target = $region17
    $region16: #{tpu_custom_call.1} parent=1 // pred_region
      %1427 = dma.done [#allocation4], 32
    $region17: #{tpu_custom_call.1} parent=1 // pred_fallthru
      _
    %1428 = vsyncpa [#allocation3], 1
    %1429 = vsyncpa [#allocation4], 1

</llo_original>
